<compile_context>
chip_gen: v7x
topology: tpu7x:2x2x1
jax: 0.10.0
libtpu: 0.0.40
codegen_flags: <defaults>
</compile_context>

<pallas_src>
import functools

import jax
import jax.numpy as jnp
from jax.experimental import pallas as pl
from jax.experimental.pallas import tpu as pltpu


# ----------------------------- Pallas kernel -----------------------------

def _stack_ln_kernel(x_ref, g_ref, b_ref, o_ref, *, eps):
    """x_ref/o_ref: (C, T)  with C = 2*n_filters, T = spatial tile (lanes).

    g_ref/b_ref: (C, 1) per-channel affine params ([v_gamma; h_gamma] etc.).
    Each half of the channel dim is layer-normalized independently over its
    n_filters channels, per spatial position (lane column).
    """
    C = x_ref.shape[0]
    F = C // 2
    for lo, hi in ((0, F), (F, C)):           # statically unrolled: v stack, h stack
        h = x_ref[lo:hi, :].astype(jnp.float32)           # (F, T)
        mu = jnp.mean(h, axis=0, keepdims=True)           # (1, T)
        d = h - mu
        var = jnp.mean(d * d, axis=0, keepdims=True)      # (1, T)  (biased, like PyTorch LN)
        xn = d * jax.lax.rsqrt(var + eps)
        g = g_ref[lo:hi, :]                                # (F, 1) -> lane-broadcast
        b = b_ref[lo:hi, :]
        o_ref[lo:hi, :] = (xn * g + b).astype(o_ref.dtype)


# ----------------------------- wrapper -----------------------------

def _choose_hw_tile(hw, cap=2048):
    """Largest lane-dense (multiple-of-128) tile <= cap that divides H*W."""
    if hw % 128 != 0:
        return hw          # full-extent block (still correct, just not lane-dense)
    t = min(hw, cap)
    while hw % t != 0:
        t -= 128
    return t


def stack_layer_norm(x, v_gamma, v_beta, h_gamma, h_beta, *, eps=1e-5):
    """Pallas StackLayerNorm.  x: (B, 2F, H, W) NCHW -> (B, 2F, H, W)."""
    B, C, H, W = x.shape
    assert C % 2 == 0, "channel dim must be 2 * n_filters"
    HW = H * W
    T = _choose_hw_tile(HW)

    xr = x.reshape(B, C, HW)                                   # free reshape (contiguous)
    g = jnp.concatenate([v_gamma, h_gamma]).astype(jnp.float32).reshape(C, 1)
    b = jnp.concatenate([v_beta, h_beta]).astype(jnp.float32).reshape(C, 1)

    out = pl.pallas_call(
        functools.partial(_stack_ln_kernel, eps=eps),
        out_shape=jax.ShapeDtypeStruct((B, C, HW), x.dtype),
        grid=(B, HW // T),
        in_specs=[
            pl.BlockSpec((None, C, T), lambda bi, si: (bi, 0, si)),   # activations
            pl.BlockSpec((C, 1), lambda bi, si: (0, 0)),              # gamma (v;h)
            pl.BlockSpec((C, 1), lambda bi, si: (0, 0)),              # beta  (v;h)
        ],
        out_specs=pl.BlockSpec((None, C, T), lambda bi, si: (bi, 0, si)),
        compiler_params=pltpu.CompilerParams(
            dimension_semantics=("parallel", "parallel")),
    )(xr, g, b)
    return out.reshape(B, C, H, W)


# ----------------------------- pure-JAX reference -----------------------------

def stack_layer_norm_ref(x, v_gamma, v_beta, h_gamma, h_beta, eps=1e-5):
    B, C, H, W = x.shape
    F = C // 2
    xn = jnp.transpose(x, (0, 2, 3, 1))                        # NHWC like the PyTorch permute

    def ln(h, g, b):
        mu = jnp.mean(h, axis=-1, keepdims=True)
        var = jnp.mean((h - mu) ** 2, axis=-1, keepdims=True)
        return (h - mu) / jnp.sqrt(var + eps) * g + b

    v = ln(xn[..., :F], v_gamma, v_beta)
    hh = ln(xn[..., F:], h_gamma, h_beta)
    out = jnp.concatenate([v, hh], axis=-1)
    return jnp.transpose(out, (0, 3, 1, 2))


# ----------------------------- main -----------------------------

if __name__ == "__main__":
    B, F, H, W = 2, 64, 16, 16          # n_filters = 64 -> input channels 2F = 128
    C = 2 * F

    key = jax.random.PRNGKey(0)
    kx, kvg, kvb, khg, khb = jax.random.split(key, 5)
    x = jax.random.normal(kx, (B, C, H, W), jnp.float32)
    v_gamma = 1.0 + 0.1 * jax.random.normal(kvg, (F,), jnp.float32)
    v_beta = 0.1 * jax.random.normal(kvb, (F,), jnp.float32)
    h_gamma = 1.0 + 0.1 * jax.random.normal(khg, (F,), jnp.float32)
    h_beta = 0.1 * jax.random.normal(khb, (F,), jnp.float32)

    out = stack_layer_norm(x, v_gamma, v_beta, h_gamma, h_beta)
    out = jax.block_until_ready(out)

    ref = stack_layer_norm_ref(x, v_gamma, v_beta, h_gamma, h_beta)
    assert out.shape == (B, C, H, W), out.shape
    assert out.dtype == jnp.float32
    assert bool(jnp.all(jnp.isfinite(out)))
    assert bool(jnp.allclose(out, ref, atol=1e-4, rtol=1e-4)), \
        float(jnp.max(jnp.abs(out - ref)))
    print("KERNEL_OK")
</pallas_src>

<mosaic_0001>
module attributes {stable_mosaic.version = 11 : i64} {
  func.func @_stack_ln_kernel(%arg0: i32, %arg1: i32, %arg2: memref<1x128x256xf32, #tpu.memory_space<vmem>>, %arg3: memref<128x1xf32, #tpu.memory_space<vmem>>, %arg4: memref<128x1xf32, #tpu.memory_space<vmem>>, %arg5: memref<1x128x256xf32, #tpu.memory_space<vmem>>) attributes {dimension_semantics = [#tpu.dimension_semantics<parallel>, #tpu.dimension_semantics<parallel>], iteration_bounds = array<i64: 2, 1>, scalar_prefetch = 0 : i64, scratch_operands = 0 : i64, tpu.core_type = #tpu.core_type<tc>, window_params = [{transform_indices = @transform_0, window_bounds = array<i64: 1, 128, 256>}, {pipeline_mode = #tpu.pipeline_mode<synchronous>, transform_indices = @transform_1, window_bounds = array<i64: 128, 1>}, {pipeline_mode = #tpu.pipeline_mode<synchronous>, transform_indices = @transform_2, window_bounds = array<i64: 128, 1>}, {transform_indices = @transform_3, window_bounds = array<i64: 1, 128, 256>}]} {
    %c0 = arith.constant 0 : index
    %c0_0 = arith.constant 0 : index
    %c0_1 = arith.constant 0 : index
    %0 = vector.load %arg2[%c0, %c0_0, %c0_1] : memref<1x128x256xf32, #tpu.memory_space<vmem>>, vector<1x64x256xf32>
    %1 = vector.shape_cast %0 : vector<1x64x256xf32> to vector<64x256xf32>
    %cst = arith.constant dense<0.000000e+00> : vector<256xf32>
    %2 = vector.multi_reduction <add>, %1, %cst [0] : vector<64x256xf32> to vector<256xf32>
    %3 = vector.shape_cast %2 : vector<256xf32> to vector<1x256xf32>
    %cst_2 = arith.constant 6.400000e+01 : f32
    %4 = vector.broadcast %cst_2 : f32 to vector<1x256xf32>
    %5 = arith.divf %3, %4 : vector<1x256xf32>
    %6 = vector.broadcast %5 : vector<1x256xf32> to vector<64x256xf32>
    %7 = arith.subf %1, %6 : vector<64x256xf32>
    %8 = arith.mulf %7, %7 : vector<64x256xf32>
    %cst_3 = arith.constant dense<0.000000e+00> : vector<256xf32>
    %9 = vector.multi_reduction <add>, %8, %cst_3 [0] : vector<64x256xf32> to vector<256xf32>
    %10 = vector.shape_cast %9 : vector<256xf32> to vector<1x256xf32>
    %cst_4 = arith.constant 6.400000e+01 : f32
    %11 = vector.broadcast %cst_4 : f32 to vector<1x256xf32>
    %12 = arith.divf %10, %11 : vector<1x256xf32>
    %cst_5 = arith.constant 9.99999974E-6 : f32
    %13 = vector.broadcast %cst_5 : f32 to vector<1x256xf32>
    %14 = arith.addf %12, %13 : vector<1x256xf32>
    %15 = math.rsqrt %14 : vector<1x256xf32>
    %16 = vector.broadcast %15 : vector<1x256xf32> to vector<64x256xf32>
    %17 = arith.mulf %7, %16 : vector<64x256xf32>
    %c0_6 = arith.constant 0 : index
    %c0_7 = arith.constant 0 : index
    %18 = vector.load %arg3[%c0_6, %c0_7] : memref<128x1xf32, #tpu.memory_space<vmem>>, vector<64x1xf32>
    %c0_8 = arith.constant 0 : index
    %c0_9 = arith.constant 0 : index
    %19 = vector.load %arg4[%c0_8, %c0_9] : memref<128x1xf32, #tpu.memory_space<vmem>>, vector<64x1xf32>
    %20 = vector.broadcast %18 : vector<64x1xf32> to vector<64x256xf32>
    %21 = arith.mulf %17, %20 : vector<64x256xf32>
    %22 = vector.broadcast %19 : vector<64x1xf32> to vector<64x256xf32>
    %23 = arith.addf %21, %22 : vector<64x256xf32>
    %c0_10 = arith.constant 0 : index
    %c0_11 = arith.constant 0 : index
    %c0_12 = arith.constant 0 : index
    %24 = vector.load %arg5[%c0_10, %c0_11, %c0_12] : memref<1x128x256xf32, #tpu.memory_space<vmem>>, vector<1x64x256xf32>
    %25 = vector.shape_cast %24 : vector<1x64x256xf32> to vector<64x256xf32>
    %26 = vector.shape_cast %23 : vector<64x256xf32> to vector<1x64x256xf32>
    tpu.vector_store %arg5[%c0_10, %c0_11, %c0_12], %26 {strides = array<i32>} : memref<1x128x256xf32, #tpu.memory_space<vmem>>, vector<1x64x256xf32>,
    %c0_13 = arith.constant 0 : index
    %c64 = arith.constant 64 : index
    %c0_14 = arith.constant 0 : index
    %27 = vector.load %arg2[%c0_13, %c64, %c0_14] : memref<1x128x256xf32, #tpu.memory_space<vmem>>, vector<1x64x256xf32>
    %28 = vector.shape_cast %27 : vector<1x64x256xf32> to vector<64x256xf32>
    %cst_15 = arith.constant dense<0.000000e+00> : vector<256xf32>
    %29 = vector.multi_reduction <add>, %28, %cst_15 [0] : vector<64x256xf32> to vector<256xf32>
    %30 = vector.shape_cast %29 : vector<256xf32> to vector<1x256xf32>
    %cst_16 = arith.constant 6.400000e+01 : f32
    %31 = vector.broadcast %cst_16 : f32 to vector<1x256xf32>
    %32 = arith.divf %30, %31 : vector<1x256xf32>
    %33 = vector.broadcast %32 : vector<1x256xf32> to vector<64x256xf32>
    %34 = arith.subf %28, %33 : vector<64x256xf32>
    %35 = arith.mulf %34, %34 : vector<64x256xf32>
    %cst_17 = arith.constant dense<0.000000e+00> : vector<256xf32>
    %36 = vector.multi_reduction <add>, %35, %cst_17 [0] : vector<64x256xf32> to vector<256xf32>
    %37 = vector.shape_cast %36 : vector<256xf32> to vector<1x256xf32>
    %cst_18 = arith.constant 6.400000e+01 : f32
    %38 = vector.broadcast %cst_18 : f32 to vector<1x256xf32>
    %39 = arith.divf %37, %38 : vector<1x256xf32>
    %cst_19 = arith.constant 9.99999974E-6 : f32
    %40 = vector.broadcast %cst_19 : f32 to vector<1x256xf32>
    %41 = arith.addf %39, %40 : vector<1x256xf32>
    %42 = math.rsqrt %41 : vector<1x256xf32>
    %43 = vector.broadcast %42 : vector<1x256xf32> to vector<64x256xf32>
    %44 = arith.mulf %34, %43 : vector<64x256xf32>
    %c64_20 = arith.constant 64 : index
    %c0_21 = arith.constant 0 : index
    %45 = vector.load %arg3[%c64_20, %c0_21] : memref<128x1xf32, #tpu.memory_space<vmem>>, vector<64x1xf32>
    %c64_22 = arith.constant 64 : index
    %c0_23 = arith.constant 0 : index
    %46 = vector.load %arg4[%c64_22, %c0_23] : memref<128x1xf32, #tpu.memory_space<vmem>>, vector<64x1xf32>
    %47 = vector.broadcast %45 : vector<64x1xf32> to vector<64x256xf32>
    %48 = arith.mulf %44, %47 : vector<64x256xf32>
    %49 = vector.broadcast %46 : vector<64x1xf32> to vector<64x256xf32>
    %50 = arith.addf %48, %49 : vector<64x256xf32>
    %c0_24 = arith.constant 0 : index
    %c64_25 = arith.constant 64 : index
    %c0_26 = arith.constant 0 : index
    %51 = vector.load %arg5[%c0_24, %c64_25, %c0_26] : memref<1x128x256xf32, #tpu.memory_space<vmem>>, vector<1x64x256xf32>
    %52 = vector.shape_cast %51 : vector<1x64x256xf32> to vector<64x256xf32>
    %53 = vector.shape_cast %50 : vector<64x256xf32> to vector<1x64x256xf32>
    tpu.vector_store %arg5[%c0_24, %c64_25, %c0_26], %53 {strides = array<i32>} : memref<1x128x256xf32, #tpu.memory_space<vmem>>, vector<1x64x256xf32>,
    return
  }
  func.func @transform_0(%arg0: i32, %arg1: i32) -> (i32, i32, i32) {
    %c0_i32 = arith.constant 0 : i32
    %c0_i32_0 = arith.constant 0 : i32
    return %arg0, %c0_i32, %arg1 : i32, i32, i32
  }
  func.func @transform_1(%arg0: i32, %arg1: i32) -> (i32, i32) {
    %c0_i32 = arith.constant 0 : i32
    %c0_i32_0 = arith.constant 0 : i32
    %c0_i32_1 = arith.constant 0 : i32
    return %c0_i32, %c0_i32_0 : i32, i32
  }
  func.func @transform_2(%arg0: i32, %arg1: i32) -> (i32, i32) {
    %c0_i32 = arith.constant 0 : i32
    %c0_i32_0 = arith.constant 0 : i32
    %c0_i32_1 = arith.constant 0 : i32
    return %c0_i32, %c0_i32_0 : i32, i32
  }
  func.func @transform_3(%arg0: i32, %arg1: i32) -> (i32, i32, i32) {
    %c0_i32 = arith.constant 0 : i32
    %c0_i32_0 = arith.constant 0 : i32
    return %arg0, %c0_i32, %arg1 : i32, i32, i32
  }
}

</mosaic_0001>

<llo_original>
// kernel: tpu_custom_call.1
$region0: #{tpu_custom_call.1}
  #allocation0 [shape = 'u32[]', space=smem, size = 0x4, offset = 0x4, fixed_abs, tag = 'smem constant byte address 0x4 - core index']
  #allocation1 [shape = 'u32[144,128]{1,0:T(1,128)}', space=vmem, size = 0x12000, scoped, tag = 'internal scratch']
  %s0 = inlined_call_operand.hbm [shape: f32[2,128,256], index: 0, kind: input, shape index: {}]
  %s1 = inlined_call_operand.vmem [shape: f32[128,1], index: 1, kind: input, shape index: {}]
  %s2 = inlined_call_operand.vmem [shape: f32[128,1], index: 2, kind: input, shape index: {}]
  %s3 = inlined_call_operand.hbm [shape: f32[2,128,256], index: 3, kind: output, shape index: {}]
  %s4 = sld [smem:[#allocation0]]
  $region49: #{tpu_custom_call.1} parent=0
    _
  %s6 = ssub.s32 1, %s4
  %s7 = scalar_select 0, %s6, %s4
  $region1: #{tpu_custom_call.1} parent=0
    #allocation2 [shape = 'u8[262144]{0}', space=vmem, size = 0x40000, scoped, tag = 'input window, operand 0']
    #allocation3 [shape = 's32[2]{0}', space=sflag, size = 0x8, scoped, tag = 'scoped memory for tpu_custom_call.1']
    #allocation4 [shape = 's32[2]{0}', space=sflag, size = 0x8, scoped, tag = 'scoped memory for tpu_custom_call.1']
    #allocation5 [shape = 'u8[262144]{0}', space=vmem, size = 0x40000, scoped, tag = 'output window, operand 0']
    %8 = vsyncpa [#allocation3], 0
    %s9 = scalar_lea.sflag [#allocation3], 1
    %10 = vsyncpa %s9, 0
    %11 = vsyncpa [#allocation4], 0
    %s12 = scalar_lea.sflag [#allocation4], 1
    %13 = vsyncpa %s12, 0
    loop: start=0, step=1, limit=4
    $region2: #{tpu_custom_call.1} parent=1 // loop_pre_header
      _
    $region3: #{tpu_custom_call.1} parent=1 // loop_header
      %s15 = sphi 0, %s19
      %p16 = scmp.ge.s32.totalorder %s15, 4
      %s22 = sphi 0, %s34
      %s23 = sphi 0, %s30
      %s24 = sphi 0, %s22
      %s25 = sphi 0, %s23
      %s26 = sphi 0, %s24
      %s27 = sphi 0, %s25
      %s39 = sphi 0, %s41
      %s42 = sphi 0, %s39
      %s43 = sphi 0, %s42
      %s59 = sphi 0, %s43
      %s63 = sphi 0, %s63
      %s65 = sphi 0, %s63
      %s66 = sphi 0, %s65
      %s80 = sphi 0, %s66
      %s84 = sphi 0, %s84
      %s86 = sphi 0, %s84
      %s87 = sphi 0, %s86
      %s101 = sphi 0, %s87
      %s109 = sphi 0, %s111
      %s112 = sphi 0, %s109
      %s113 = sphi 0, %s112
      %s129 = sphi 0, %s113
    $region4: #{tpu_custom_call.1} parent=1 // loop_header_branch
      %18 = sbr.rel (%p16) target = $region8
    $region5: #{tpu_custom_call.1} parent=1 // loop_body
      %s20 = ssub.s32 %s15, 1
      %s21 = ssub.s32 %s15, 2
      %s28 = sadd.s32 1, %s23
      %p29 = scmp.ge.s32.totalorder %s28, 1
      %s30 = scalar_select %p29, 0, %s28
      %s31 = sadd.s32 1, %s22
      %s32 = scalar_select %p29, %s31, %s22
      %p33 = scmp.ge.s32.totalorder %s32, 2
      %s34 = scalar_select %p33, 0, %s32
      %s35 = ssub.s32 %s22, %s34
      %s36 = ssub.s32 %s23, %s30
      %s37 = sor.u32 %s35, %s36
      %p38 = scmp.eq.s32.totalorder %s37, 0
      %s40 = sadd.s32 %s39, 1
      %s41 = scalar_select %p38, %s39, %s40
      %p44 = pneg %p38
      %p45 = scmp.eq.s32.totalorder %s15, 1
      %p46 = por %p44, %p45
      %p47 = scmp.ne.s32.totalorder %s39, %s42
      %p48 = scmp.eq.s32.totalorder %s15, 0
      %p49 = por %p47, %p48
      %p50 = scmp.ne.s32.totalorder %s39, %s42
      %p51 = scmp.eq.s32.totalorder %s20, 1
      %p52 = por %p50, %p51
      %p53 = scmp.ne.s32.totalorder %s42, %s43
      %p54 = scmp.eq.s32.totalorder %s20, 0
      %p55 = por %p53, %p54
      %p56 = scmp.ne.s32.totalorder %s42, %s43
      %p57 = scmp.eq.s32.totalorder %s21, 1
      %p58 = por %p56, %p57
      %p60 = scmp.ne.s32.totalorder %s43, %s59
      %p61 = scmp.eq.s32.totalorder %s21, 0
      %p62 = por %p60, %p61
      %s64 = sadd.s32 %s63, 1
      %p67 = scmp.eq.s32.totalorder %s15, 1
      %p68 = scmp.ne.s32.totalorder %s63, %s65
      %p69 = scmp.eq.s32.totalorder %s15, 0
      %p70 = por %p68, %p69
      %p71 = scmp.ne.s32.totalorder %s63, %s65
      %p72 = scmp.eq.s32.totalorder %s20, 1
      %p73 = por %p71, %p72
      %p74 = scmp.ne.s32.totalorder %s65, %s66
      %p75 = scmp.eq.s32.totalorder %s20, 0
      %p76 = por %p74, %p75
      %p77 = scmp.ne.s32.totalorder %s65, %s66
      %p78 = scmp.eq.s32.totalorder %s21, 1
      %p79 = por %p77, %p78
      %p81 = scmp.ne.s32.totalorder %s66, %s80
      %p82 = scmp.eq.s32.totalorder %s21, 0
      %p83 = por %p81, %p82
      %s85 = sadd.s32 %s84, 1
      %p88 = scmp.eq.s32.totalorder %s15, 1
      %p89 = scmp.ne.s32.totalorder %s84, %s86
      %p90 = scmp.eq.s32.totalorder %s15, 0
      %p91 = por %p89, %p90
      %p92 = scmp.ne.s32.totalorder %s84, %s86
      %p93 = scmp.eq.s32.totalorder %s20, 1
      %p94 = por %p92, %p93
      %p95 = scmp.ne.s32.totalorder %s86, %s87
      %p96 = scmp.eq.s32.totalorder %s20, 0
      %p97 = por %p95, %p96
      %p98 = scmp.ne.s32.totalorder %s86, %s87
      %p99 = scmp.eq.s32.totalorder %s21, 1
      %p100 = por %p98, %p99
      %p102 = scmp.ne.s32.totalorder %s87, %s101
      %p103 = scmp.eq.s32.totalorder %s21, 0
      %p104 = por %p102, %p103
      %s105 = ssub.s32 %s22, %s34
      %s106 = ssub.s32 %s23, %s30
      %s107 = sor.u32 %s105, %s106
      %p108 = scmp.eq.s32.totalorder %s107, 0
      %s110 = sadd.s32 %s109, 1
      %s111 = scalar_select %p108, %s109, %s110
      %p114 = pneg %p108
      %p115 = scmp.eq.s32.totalorder %s15, 1
      %p116 = por %p114, %p115
      %p117 = scmp.ne.s32.totalorder %s109, %s112
      %p118 = scmp.eq.s32.totalorder %s15, 0
      %p119 = por %p117, %p118
      %p120 = scmp.ne.s32.totalorder %s109, %s112
      %p121 = scmp.eq.s32.totalorder %s20, 1
      %p122 = por %p120, %p121
      %p123 = scmp.ne.s32.totalorder %s112, %s113
      %p124 = scmp.eq.s32.totalorder %s20, 0
      %p125 = por %p123, %p124
      %p126 = scmp.ne.s32.totalorder %s112, %s113
      %p127 = scmp.eq.s32.totalorder %s21, 1
      %p128 = por %p126, %p127
      %p130 = scmp.ne.s32.totalorder %s113, %s129
      %p131 = scmp.eq.s32.totalorder %s21, 0
      %p132 = por %p130, %p131
      %p133 = scmp.le.s32.totalorder 1, %s15
      %p134 = scmp.lt.s32.totalorder %s15, 3
      %p135 = pnand %p133, %p134
      %p136 = pneg %p135
      // Predicated region
      $region9: #{tpu_custom_call.1} parent=5 // pred_check
        _
      $region10: #{tpu_custom_call.1} parent=5 // pred_check_branch
        %138 = sbr.rel (%p135) target = $region12
      $region11: #{tpu_custom_call.1} parent=5 // pred_region
        %s139 = ssub.s32 %s15, 1
        // Predicated region
        $region13: #{tpu_custom_call.1} parent=11 // pred_check
          %p140 = pneg %p76
        $region14: #{tpu_custom_call.1} parent=11 // pred_check_branch
          %142 = sbr.rel (%p140) target = $region16
        $region15: #{tpu_custom_call.1} parent=11 // pred_region
          _
        $region16: #{tpu_custom_call.1} parent=11 // pred_fallthru
          _
        // Predicated region
        $region17: #{tpu_custom_call.1} parent=11 // pred_check
          %p143 = pneg %p97
        $region18: #{tpu_custom_call.1} parent=11 // pred_check_branch
          %145 = sbr.rel (%p143) target = $region20
        $region19: #{tpu_custom_call.1} parent=11 // pred_region
          _
        $region20: #{tpu_custom_call.1} parent=11 // pred_fallthru
          _
      $region12: #{tpu_custom_call.1} parent=5 // pred_fallthru
        _
      %p146 = scmp.lt.s32.totalorder %s15, 2
      // Predicated region
      $region21: #{tpu_custom_call.1} parent=5 // pred_check
        %p147 = pneg %p146
      $region22: #{tpu_custom_call.1} parent=5 // pred_check_branch
        %149 = sbr.rel (%p147) target = $region24
      $region23: #{tpu_custom_call.1} parent=5 // pred_region
        // Predicated region
        $region25: #{tpu_custom_call.1} parent=23 // pred_check
          %p150 = pneg %p49
        $region26: #{tpu_custom_call.1} parent=23 // pred_check_branch
          %152 = sbr.rel (%p150) target = $region28
        $region27: #{tpu_custom_call.1} parent=23 // pred_region
          %s153 = sand.u32 %s39, 1
          %s154 = scalar_lea.sflag [#allocation3], %s153
          %s155 = sand.u32 %s39, 1
          %s156 = smul.addr %s155, 256
          %s157 = scalar_lea.vmem [#allocation2], %s156
          %s158 = smul.u32 2, %s23
          %s160 = ssub.s32 4096, 4096
          %161 = vsyncadd %s154, %s160
          %s162 = smul.addr %s22, 32
          %s163 = sadd.s32 %s158, %s162
          %s164 = smul.addr %s163, 128
          %s165 = scalar_lea.hbm %s0, %s164
          %s166 = sshll.u32 %s157, 4
          %s167 = int_to_ptr.vmem [resolvable:$true] %s166
          %172 = dma.hbm_to_vmem [thread:$0]  %s165, 4096, %s167, %s154, 256, 256, 16
        $region28: #{tpu_custom_call.1} parent=23 // pred_fallthru
          _
      $region24: #{tpu_custom_call.1} parent=5 // pred_fallthru
        _
      %p173 = scmp.le.s32.totalorder 1, %s15
      %p174 = scmp.lt.s32.totalorder %s15, 3
      %p175 = pnand %p173, %p174
      %p176 = pneg %p175
      // Predicated region
      $region29: #{tpu_custom_call.1} parent=5 // pred_check
        _
      $region30: #{tpu_custom_call.1} parent=5 // pred_check_branch
        %178 = sbr.rel (%p175) target = $region32
      $region31: #{tpu_custom_call.1} parent=5 // pred_region
        %s179 = ssub.s32 %s15, 1
        %s180 = sand.u32 %s42, 1
        %s181 = scalar_lea.sflag [#allocation3], %s180
        %s182 = sand.u32 %s42, 1
        %s183 = smul.addr %s182, 256
        %s184 = scalar_lea.vmem [#allocation2], %s183
        // Predicated region
        $region33: #{tpu_custom_call.1} parent=31 // pred_check
          %p185 = pneg %p55
        $region34: #{tpu_custom_call.1} parent=31 // pred_check_branch
          %187 = sbr.rel (%p185) target = $region36
        $region35: #{tpu_custom_call.1} parent=31 // pred_region
          %188 = dma.done %s181, 4096
        $region36: #{tpu_custom_call.1} parent=31 // pred_fallthru
          _
        %s189 = sand.u32 %s42, 1
        %s190 = scalar_lea.sflag [#allocation3], %s189
        %s191 = sand.u32 %s42, 1
        %s192 = smul.addr %s191, 256
        %s193 = scalar_lea.vmem [#allocation2], %s192
        %p194 = pneg %p55
        %p195 = pneg %p52
        %p196 = pneg %p76
        %p197 = pneg %p73
        %p198 = pneg %p97
        %p199 = pneg %p94
        %p200 = pneg %p125
        %p201 = pneg %p122
        %s202 = sand.u32 %s112, 1
        %s203 = scalar_lea.sflag [#allocation4], %s202
        %s204 = sand.u32 %s112, 1
        %s205 = smul.addr %s204, 256
        %s206 = scalar_lea.vmem [#allocation5], %s205
        %s207 = smul.u32 2, %s25
        %s208 = smul.u32 2, %s25
        %v209 = vld [vmem:[%s184] sm:$0xff]
        %v210 = vld [vmem:[%s184 + $0x8] sm:$0xff]
        %v211 = vld [vmem:[%s184 + $0x10] sm:$0xff]
        %v212 = vld [vmem:[%s184 + $0x18] sm:$0xff]
        %v213 = vld [vmem:[%s184 + $0x20] sm:$0xff]
        %v214 = vld [vmem:[%s184 + $0x28] sm:$0xff]
        %v215 = vld [vmem:[%s184 + $0x30] sm:$0xff]
        %v216 = vld [vmem:[%s184 + $0x38] sm:$0xff]
        %v217 = vld [vmem:[%s184 + $0x40] sm:$0xff]
        %v218 = vld [vmem:[%s184 + $0x48] sm:$0xff]
        %v219 = vld [vmem:[%s184 + $0x50] sm:$0xff]
        %v220 = vld [vmem:[%s184 + $0x58] sm:$0xff]
        %v221 = vld [vmem:[%s184 + $0x60] sm:$0xff]
        %v222 = vld [vmem:[%s184 + $0x68] sm:$0xff]
        %v223 = vld [vmem:[%s184 + $0x70] sm:$0xff]
        %v224 = vld [vmem:[%s184 + $0x78] sm:$0xff]
        %v225 = vadd.f32 %v209, %v211
        %v226 = vadd.f32 %v225, %v213
        %v227 = vadd.f32 %v226, %v215
        %v228 = vadd.f32 %v227, %v217
        %v229 = vadd.f32 %v228, %v219
        %v230 = vadd.f32 %v229, %v221
        %v231 = vadd.f32 %v230, %v223
        %v232 = vrot.slane %v231, 4
        %v233 = vadd.f32 %v231, %v232
        %v234 = vrot.slane %v233, 2
        %v235 = vadd.f32 %v233, %v234
        %v236 = vrot.slane %v235, 1
        %v237 = vadd.f32 %v235, %v236
        %v238 = vadd.f32 %v210, %v212
        %v239 = vadd.f32 %v238, %v214
        %v240 = vadd.f32 %v239, %v216
        %v241 = vadd.f32 %v240, %v218
        %v242 = vadd.f32 %v241, %v220
        %v243 = vadd.f32 %v242, %v222
        %v244 = vadd.f32 %v243, %v224
        %v245 = vrot.slane %v244, 4
        %v246 = vadd.f32 %v244, %v245
        %v247 = vrot.slane %v246, 2
        %v248 = vadd.f32 %v246, %v247
        %v249 = vrot.slane %v248, 1
        %v250 = vadd.f32 %v248, %v249
        %v251 = vrcp.pop 64.0
        %v252 = vmul.f32 %v237, %v251
        %v253 = vmul.f32 %v250, %v251
        %v254 = vsub.f32 %v209, %v252
        %v255 = vsub.f32 %v210, %v253
        %v256 = vsub.f32 %v211, %v252
        %v257 = vsub.f32 %v212, %v253
        %v258 = vsub.f32 %v213, %v252
        %v259 = vsub.f32 %v214, %v253
        %v260 = vsub.f32 %v215, %v252
        %v261 = vsub.f32 %v216, %v253
        %v262 = vsub.f32 %v217, %v252
        %v263 = vsub.f32 %v218, %v253
        %v264 = vsub.f32 %v219, %v252
        %v265 = vsub.f32 %v220, %v253
        %v266 = vsub.f32 %v221, %v252
        %v267 = vsub.f32 %v222, %v253
        %v268 = vsub.f32 %v223, %v252
        %v269 = vsub.f32 %v224, %v253
        %v270 = vmul.f32 %v254, %v254
        %v271 = vmul.f32 %v255, %v255
        %v272 = vmul.f32 %v256, %v256
        %v273 = vmul.f32 %v257, %v257
        %v274 = vmul.f32 %v258, %v258
        %v275 = vmul.f32 %v259, %v259
        %v276 = vmul.f32 %v260, %v260
        %v277 = vmul.f32 %v261, %v261
        %v278 = vmul.f32 %v262, %v262
        %v279 = vmul.f32 %v263, %v263
        %v280 = vmul.f32 %v264, %v264
        %v281 = vmul.f32 %v265, %v265
        %v282 = vmul.f32 %v266, %v266
        %v283 = vmul.f32 %v267, %v267
        %v284 = vmul.f32 %v268, %v268
        %v285 = vmul.f32 %v269, %v269
        %v286 = vadd.f32 %v270, %v272
        %v287 = vadd.f32 %v286, %v274
        %v288 = vadd.f32 %v287, %v276
        %v289 = vadd.f32 %v288, %v278
        %v290 = vadd.f32 %v289, %v280
        %v291 = vadd.f32 %v290, %v282
        %v292 = vadd.f32 %v291, %v284
        %v293 = vrot.slane %v292, 4
        %v294 = vadd.f32 %v292, %v293
        %v295 = vrot.slane %v294, 2
        %v296 = vadd.f32 %v294, %v295
        %v297 = vrot.slane %v296, 1
        %v298 = vadd.f32 %v296, %v297
        %v299 = vadd.f32 %v271, %v273
        %v300 = vadd.f32 %v299, %v275
        %v301 = vadd.f32 %v300, %v277
        %v302 = vadd.f32 %v301, %v279
        %v303 = vadd.f32 %v302, %v281
        %v304 = vadd.f32 %v303, %v283
        %v305 = vadd.f32 %v304, %v285
        %v306 = vrot.slane %v305, 4
        %v307 = vadd.f32 %v305, %v306
        %v308 = vrot.slane %v307, 2
        %v309 = vadd.f32 %v307, %v308
        %v310 = vrot.slane %v309, 1
        %v311 = vadd.f32 %v309, %v310
        %v312 = vmul.f32 %v298, %v251
        %v313 = vmul.f32 %v311, %v251
        %v314 = vadd.f32 %v312, 1e-05
        %v315 = vadd.f32 %v313, 1e-05
        %v316 = vrsqrt.pop %v314
        %v317 = vrsqrt.pop %v315
        %v318 = vmul.f32 %v254, %v316
        %v319 = vmul.f32 %v255, %v317
        %v320 = vmul.f32 %v256, %v316
        %v321 = vmul.f32 %v257, %v317
        %v322 = vmul.f32 %v258, %v316
        %v323 = vmul.f32 %v259, %v317
        %v324 = vmul.f32 %v260, %v316
        %v325 = vmul.f32 %v261, %v317
        %v326 = vmul.f32 %v262, %v316
        %v327 = vmul.f32 %v263, %v317
        %v328 = vmul.f32 %v264, %v316
        %v329 = vmul.f32 %v265, %v317
        %v330 = vmul.f32 %v266, %v316
        %v331 = vmul.f32 %v267, %v317
        %v332 = vmul.f32 %v268, %v316
        %v333 = vmul.f32 %v269, %v317
        %v334 = vld [vmem:[%s1] sm:$0xff]
        %v335 = vld [vmem:[%s1 + $0x8] sm:$0xff]
        %v336 = vld [vmem:[%s1 + $0x10] sm:$0xff]
        %v337 = vld [vmem:[%s1 + $0x18] sm:$0xff]
        %v338 = vld [vmem:[%s1 + $0x20] sm:$0xff]
        %v339 = vld [vmem:[%s1 + $0x28] sm:$0xff]
        %v340 = vld [vmem:[%s1 + $0x30] sm:$0xff]
        %v341 = vld [vmem:[%s1 + $0x38] sm:$0xff]
        %v342 = vld [vmem:[%s2] sm:$0xff]
        %v343 = vld [vmem:[%s2 + $0x8] sm:$0xff]
        %v344 = vld [vmem:[%s2 + $0x10] sm:$0xff]
        %v345 = vld [vmem:[%s2 + $0x18] sm:$0xff]
        %v346 = vld [vmem:[%s2 + $0x20] sm:$0xff]
        %v347 = vld [vmem:[%s2 + $0x28] sm:$0xff]
        %v348 = vld [vmem:[%s2 + $0x30] sm:$0xff]
        %v349 = vld [vmem:[%s2 + $0x38] sm:$0xff]
        %351 = vset.pattern.permute.xlu0 0
        %352 = vperm.xlu0 %351, %v334
        %v353 = vpop.permute.xlu0 %352
        %356 = vset.pattern.permute.xlu0 0
        %357 = vperm.xlu0 %356, %v335
        %v358 = vpop.permute.xlu0 %357
        %361 = vset.pattern.permute.xlu0 0
        %362 = vperm.xlu0 %361, %v336
        %v363 = vpop.permute.xlu0 %362
        %366 = vset.pattern.permute.xlu0 0
        %367 = vperm.xlu0 %366, %v337
        %v368 = vpop.permute.xlu0 %367
        %371 = vset.pattern.permute.xlu0 0
        %372 = vperm.xlu0 %371, %v338
        %v373 = vpop.permute.xlu0 %372
        %376 = vset.pattern.permute.xlu0 0
        %377 = vperm.xlu0 %376, %v339
        %v378 = vpop.permute.xlu0 %377
        %381 = vset.pattern.permute.xlu0 0
        %382 = vperm.xlu0 %381, %v340
        %v383 = vpop.permute.xlu0 %382
        %386 = vset.pattern.permute.xlu0 0
        %387 = vperm.xlu0 %386, %v341
        %v388 = vpop.permute.xlu0 %387
        %v390 = vmul.f32 %v318, %v353
        %v391 = vmul.f32 %v319, %v353
        %v392 = vmul.f32 %v320, %v358
        %v393 = vmul.f32 %v321, %v358
        %v394 = vmul.f32 %v322, %v363
        %v395 = vmul.f32 %v323, %v363
        %v396 = vmul.f32 %v324, %v368
        %v397 = vmul.f32 %v325, %v368
        %v398 = vmul.f32 %v326, %v373
        %v399 = vmul.f32 %v327, %v373
        %v400 = vmul.f32 %v328, %v378
        %v401 = vmul.f32 %v329, %v378
        %v402 = vmul.f32 %v330, %v383
        %v403 = vmul.f32 %v331, %v383
        %v404 = vmul.f32 %v332, %v388
        %v405 = vmul.f32 %v333, %v388
        %407 = vset.pattern.permute.xlu0 0
        %408 = vperm.xlu0 %407, %v342
        %v409 = vpop.permute.xlu0 %408
        %412 = vset.pattern.permute.xlu0 0
        %413 = vperm.xlu0 %412, %v343
        %v414 = vpop.permute.xlu0 %413
        %417 = vset.pattern.permute.xlu0 0
        %418 = vperm.xlu0 %417, %v344
        %v419 = vpop.permute.xlu0 %418
        %422 = vset.pattern.permute.xlu0 0
        %423 = vperm.xlu0 %422, %v345
        %v424 = vpop.permute.xlu0 %423
        %427 = vset.pattern.permute.xlu0 0
        %428 = vperm.xlu0 %427, %v346
        %v429 = vpop.permute.xlu0 %428
        %432 = vset.pattern.permute.xlu0 0
        %433 = vperm.xlu0 %432, %v347
        %v434 = vpop.permute.xlu0 %433
        %437 = vset.pattern.permute.xlu0 0
        %438 = vperm.xlu0 %437, %v348
        %v439 = vpop.permute.xlu0 %438
        %442 = vset.pattern.permute.xlu0 0
        %443 = vperm.xlu0 %442, %v349
        %v444 = vpop.permute.xlu0 %443
        %v446 = vadd.f32 %v390, %v409
        %v447 = vadd.f32 %v391, %v409
        %v448 = vadd.f32 %v392, %v414
        %v449 = vadd.f32 %v393, %v414
        %v450 = vadd.f32 %v394, %v419
        %v451 = vadd.f32 %v395, %v419
        %v452 = vadd.f32 %v396, %v424
        %v453 = vadd.f32 %v397, %v424
        %v454 = vadd.f32 %v398, %v429
        %v455 = vadd.f32 %v399, %v429
        %v456 = vadd.f32 %v400, %v434
        %v457 = vadd.f32 %v401, %v434
        %v458 = vadd.f32 %v402, %v439
        %v459 = vadd.f32 %v403, %v439
        %v460 = vadd.f32 %v404, %v444
        %v461 = vadd.f32 %v405, %v444
        %462 = vst [vmem:[%s206] sm:$0xff] %v446
        %463 = vst [vmem:[%s206 + $0x8] sm:$0xff] %v447
        %464 = vst [vmem:[%s206 + $0x10] sm:$0xff] %v448
        %465 = vst [vmem:[%s206 + $0x18] sm:$0xff] %v449
        %466 = vst [vmem:[%s206 + $0x20] sm:$0xff] %v450
        %467 = vst [vmem:[%s206 + $0x28] sm:$0xff] %v451
        %468 = vst [vmem:[%s206 + $0x30] sm:$0xff] %v452
        %469 = vst [vmem:[%s206 + $0x38] sm:$0xff] %v453
        %470 = vst [vmem:[%s206 + $0x40] sm:$0xff] %v454
        %471 = vst [vmem:[%s206 + $0x48] sm:$0xff] %v455
        %472 = vst [vmem:[%s206 + $0x50] sm:$0xff] %v456
        %473 = vst [vmem:[%s206 + $0x58] sm:$0xff] %v457
        %474 = vst [vmem:[%s206 + $0x60] sm:$0xff] %v458
        %475 = vst [vmem:[%s206 + $0x68] sm:$0xff] %v459
        %476 = vst [vmem:[%s206 + $0x70] sm:$0xff] %v460
        %477 = vst [vmem:[%s206 + $0x78] sm:$0xff] %v461
        %v478 = vld [vmem:[%s184 + $0x80] sm:$0xff]
        %v479 = vld [vmem:[%s184 + $0x88] sm:$0xff]
        %v480 = vld [vmem:[%s184 + $0x90] sm:$0xff]
        %v481 = vld [vmem:[%s184 + $0x98] sm:$0xff]
        %v482 = vld [vmem:[%s184 + $0xa0] sm:$0xff]
        %v483 = vld [vmem:[%s184 + $0xa8] sm:$0xff]
        %v484 = vld [vmem:[%s184 + $0xb0] sm:$0xff]
        %v485 = vld [vmem:[%s184 + $0xb8] sm:$0xff]
        %v486 = vld [vmem:[%s184 + $0xc0] sm:$0xff]
        %v487 = vld [vmem:[%s184 + $0xc8] sm:$0xff]
        %v488 = vld [vmem:[%s184 + $0xd0] sm:$0xff]
        %v489 = vld [vmem:[%s184 + $0xd8] sm:$0xff]
        %v490 = vld [vmem:[%s184 + $0xe0] sm:$0xff]
        %v491 = vld [vmem:[%s184 + $0xe8] sm:$0xff]
        %v492 = vld [vmem:[%s184 + $0xf0] sm:$0xff]
        %v493 = vld [vmem:[%s184 + $0xf8] sm:$0xff]
        %v494 = vadd.f32 %v478, %v480
        %v495 = vadd.f32 %v494, %v482
        %v496 = vadd.f32 %v495, %v484
        %v497 = vadd.f32 %v496, %v486
        %v498 = vadd.f32 %v497, %v488
        %v499 = vadd.f32 %v498, %v490
        %v500 = vadd.f32 %v499, %v492
        %v501 = vrot.slane %v500, 4
        %v502 = vadd.f32 %v500, %v501
        %v503 = vrot.slane %v502, 2
        %v504 = vadd.f32 %v502, %v503
        %v505 = vrot.slane %v504, 1
        %v506 = vadd.f32 %v504, %v505
        %v507 = vadd.f32 %v479, %v481
        %v508 = vadd.f32 %v507, %v483
        %v509 = vadd.f32 %v508, %v485
        %v510 = vadd.f32 %v509, %v487
        %v511 = vadd.f32 %v510, %v489
        %v512 = vadd.f32 %v511, %v491
        %v513 = vadd.f32 %v512, %v493
        %v514 = vrot.slane %v513, 4
        %v515 = vadd.f32 %v513, %v514
        %v516 = vrot.slane %v515, 2
        %v517 = vadd.f32 %v515, %v516
        %v518 = vrot.slane %v517, 1
        %v519 = vadd.f32 %v517, %v518
        %v520 = vmul.f32 %v506, %v251
        %v521 = vmul.f32 %v519, %v251
        %v522 = vsub.f32 %v478, %v520
        %v523 = vsub.f32 %v479, %v521
        %v524 = vsub.f32 %v480, %v520
        %v525 = vsub.f32 %v481, %v521
        %v526 = vsub.f32 %v482, %v520
        %v527 = vsub.f32 %v483, %v521
        %v528 = vsub.f32 %v484, %v520
        %v529 = vsub.f32 %v485, %v521
        %v530 = vsub.f32 %v486, %v520
        %v531 = vsub.f32 %v487, %v521
        %v532 = vsub.f32 %v488, %v520
        %v533 = vsub.f32 %v489, %v521
        %v534 = vsub.f32 %v490, %v520
        %v535 = vsub.f32 %v491, %v521
        %v536 = vsub.f32 %v492, %v520
        %v537 = vsub.f32 %v493, %v521
        %v538 = vmul.f32 %v522, %v522
        %v539 = vmul.f32 %v523, %v523
        %v540 = vmul.f32 %v524, %v524
        %v541 = vmul.f32 %v525, %v525
        %v542 = vmul.f32 %v526, %v526
        %v543 = vmul.f32 %v527, %v527
        %v544 = vmul.f32 %v528, %v528
        %v545 = vmul.f32 %v529, %v529
        %v546 = vmul.f32 %v530, %v530
        %v547 = vmul.f32 %v531, %v531
        %v548 = vmul.f32 %v532, %v532
        %v549 = vmul.f32 %v533, %v533
        %v550 = vmul.f32 %v534, %v534
        %v551 = vmul.f32 %v535, %v535
        %v552 = vmul.f32 %v536, %v536
        %v553 = vmul.f32 %v537, %v537
        %v554 = vadd.f32 %v538, %v540
        %v555 = vadd.f32 %v554, %v542
        %v556 = vadd.f32 %v555, %v544
        %v557 = vadd.f32 %v556, %v546
        %v558 = vadd.f32 %v557, %v548
        %v559 = vadd.f32 %v558, %v550
        %v560 = vadd.f32 %v559, %v552
        %v561 = vrot.slane %v560, 4
        %v562 = vadd.f32 %v560, %v561
        %v563 = vrot.slane %v562, 2
        %v564 = vadd.f32 %v562, %v563
        %v565 = vrot.slane %v564, 1
        %v566 = vadd.f32 %v564, %v565
        %v567 = vadd.f32 %v539, %v541
        %v568 = vadd.f32 %v567, %v543
        %v569 = vadd.f32 %v568, %v545
        %v570 = vadd.f32 %v569, %v547
        %v571 = vadd.f32 %v570, %v549
        %v572 = vadd.f32 %v571, %v551
        %v573 = vadd.f32 %v572, %v553
        %v574 = vrot.slane %v573, 4
        %v575 = vadd.f32 %v573, %v574
        %v576 = vrot.slane %v575, 2
        %v577 = vadd.f32 %v575, %v576
        %v578 = vrot.slane %v577, 1
        %v579 = vadd.f32 %v577, %v578
        %v580 = vmul.f32 %v566, %v251
        %v581 = vmul.f32 %v579, %v251
        %v582 = vadd.f32 %v580, 1e-05
        %v583 = vadd.f32 %v581, 1e-05
        %v584 = vrsqrt.pop %v582
        %v585 = vrsqrt.pop %v583
        %v586 = vmul.f32 %v522, %v584
        %v587 = vmul.f32 %v523, %v585
        %v588 = vmul.f32 %v524, %v584
        %v589 = vmul.f32 %v525, %v585
        %v590 = vmul.f32 %v526, %v584
        %v591 = vmul.f32 %v527, %v585
        %v592 = vmul.f32 %v528, %v584
        %v593 = vmul.f32 %v529, %v585
        %v594 = vmul.f32 %v530, %v584
        %v595 = vmul.f32 %v531, %v585
        %v596 = vmul.f32 %v532, %v584
        %v597 = vmul.f32 %v533, %v585
        %v598 = vmul.f32 %v534, %v584
        %v599 = vmul.f32 %v535, %v585
        %v600 = vmul.f32 %v536, %v584
        %v601 = vmul.f32 %v537, %v585
        %v602 = vld [vmem:[%s1 + $0x40] sm:$0xff]
        %v603 = vld [vmem:[%s1 + $0x48] sm:$0xff]
        %v604 = vld [vmem:[%s1 + $0x50] sm:$0xff]
        %v605 = vld [vmem:[%s1 + $0x58] sm:$0xff]
        %v606 = vld [vmem:[%s1 + $0x60] sm:$0xff]
        %v607 = vld [vmem:[%s1 + $0x68] sm:$0xff]
        %v608 = vld [vmem:[%s1 + $0x70] sm:$0xff]
        %v609 = vld [vmem:[%s1 + $0x78] sm:$0xff]
        %v610 = vld [vmem:[%s2 + $0x40] sm:$0xff]
        %v611 = vld [vmem:[%s2 + $0x48] sm:$0xff]
        %v612 = vld [vmem:[%s2 + $0x50] sm:$0xff]
        %v613 = vld [vmem:[%s2 + $0x58] sm:$0xff]
        %v614 = vld [vmem:[%s2 + $0x60] sm:$0xff]
        %v615 = vld [vmem:[%s2 + $0x68] sm:$0xff]
        %v616 = vld [vmem:[%s2 + $0x70] sm:$0xff]
        %v617 = vld [vmem:[%s2 + $0x78] sm:$0xff]
        %619 = vset.pattern.permute.xlu0 0
        %620 = vperm.xlu0 %619, %v602
        %v621 = vpop.permute.xlu0 %620
        %624 = vset.pattern.permute.xlu0 0
        %625 = vperm.xlu0 %624, %v603
        %v626 = vpop.permute.xlu0 %625
        %629 = vset.pattern.permute.xlu0 0
        %630 = vperm.xlu0 %629, %v604
        %v631 = vpop.permute.xlu0 %630
        %634 = vset.pattern.permute.xlu0 0
        %635 = vperm.xlu0 %634, %v605
        %v636 = vpop.permute.xlu0 %635
        %639 = vset.pattern.permute.xlu0 0
        %640 = vperm.xlu0 %639, %v606
        %v641 = vpop.permute.xlu0 %640
        %644 = vset.pattern.permute.xlu0 0
        %645 = vperm.xlu0 %644, %v607
        %v646 = vpop.permute.xlu0 %645
        %649 = vset.pattern.permute.xlu0 0
        %650 = vperm.xlu0 %649, %v608
        %v651 = vpop.permute.xlu0 %650
        %654 = vset.pattern.permute.xlu0 0
        %655 = vperm.xlu0 %654, %v609
        %v656 = vpop.permute.xlu0 %655
        %v658 = vmul.f32 %v586, %v621
        %v659 = vmul.f32 %v587, %v621
        %v660 = vmul.f32 %v588, %v626
        %v661 = vmul.f32 %v589, %v626
        %v662 = vmul.f32 %v590, %v631
        %v663 = vmul.f32 %v591, %v631
        %v664 = vmul.f32 %v592, %v636
        %v665 = vmul.f32 %v593, %v636
        %v666 = vmul.f32 %v594, %v641
        %v667 = vmul.f32 %v595, %v641
        %v668 = vmul.f32 %v596, %v646
        %v669 = vmul.f32 %v597, %v646
        %v670 = vmul.f32 %v598, %v651
        %v671 = vmul.f32 %v599, %v651
        %v672 = vmul.f32 %v600, %v656
        %v673 = vmul.f32 %v601, %v656
        %675 = vset.pattern.permute.xlu0 0
        %676 = vperm.xlu0 %675, %v610
        %v677 = vpop.permute.xlu0 %676
        %680 = vset.pattern.permute.xlu0 0
        %681 = vperm.xlu0 %680, %v611
        %v682 = vpop.permute.xlu0 %681
        %685 = vset.pattern.permute.xlu0 0
        %686 = vperm.xlu0 %685, %v612
        %v687 = vpop.permute.xlu0 %686
        %690 = vset.pattern.permute.xlu0 0
        %691 = vperm.xlu0 %690, %v613
        %v692 = vpop.permute.xlu0 %691
        %695 = vset.pattern.permute.xlu0 0
        %696 = vperm.xlu0 %695, %v614
        %v697 = vpop.permute.xlu0 %696
        %700 = vset.pattern.permute.xlu0 0
        %701 = vperm.xlu0 %700, %v615
        %v702 = vpop.permute.xlu0 %701
        %705 = vset.pattern.permute.xlu0 0
        %706 = vperm.xlu0 %705, %v616
        %v707 = vpop.permute.xlu0 %706
        %710 = vset.pattern.permute.xlu0 0
        %711 = vperm.xlu0 %710, %v617
        %v712 = vpop.permute.xlu0 %711
        %v714 = vadd.f32 %v658, %v677
        %v715 = vadd.f32 %v659, %v677
        %v716 = vadd.f32 %v660, %v682
        %v717 = vadd.f32 %v661, %v682
        %v718 = vadd.f32 %v662, %v687
        %v719 = vadd.f32 %v663, %v687
        %v720 = vadd.f32 %v664, %v692
        %v721 = vadd.f32 %v665, %v692
        %v722 = vadd.f32 %v666, %v697
        %v723 = vadd.f32 %v667, %v697
        %v724 = vadd.f32 %v668, %v702
        %v725 = vadd.f32 %v669, %v702
        %v726 = vadd.f32 %v670, %v707
        %v727 = vadd.f32 %v671, %v707
        %v728 = vadd.f32 %v672, %v712
        %v729 = vadd.f32 %v673, %v712
        %730 = vst [vmem:[%s206 + $0x80] sm:$0xff] %v714
        %731 = vst [vmem:[%s206 + $0x88] sm:$0xff] %v715
        %732 = vst [vmem:[%s206 + $0x90] sm:$0xff] %v716
        %733 = vst [vmem:[%s206 + $0x98] sm:$0xff] %v717
        %734 = vst [vmem:[%s206 + $0xa0] sm:$0xff] %v718
        %735 = vst [vmem:[%s206 + $0xa8] sm:$0xff] %v719
        %736 = vst [vmem:[%s206 + $0xb0] sm:$0xff] %v720
        %737 = vst [vmem:[%s206 + $0xb8] sm:$0xff] %v721
        %738 = vst [vmem:[%s206 + $0xc0] sm:$0xff] %v722
        %739 = vst [vmem:[%s206 + $0xc8] sm:$0xff] %v723
        %740 = vst [vmem:[%s206 + $0xd0] sm:$0xff] %v724
        %741 = vst [vmem:[%s206 + $0xd8] sm:$0xff] %v725
        %742 = vst [vmem:[%s206 + $0xe0] sm:$0xff] %v726
        %743 = vst [vmem:[%s206 + $0xe8] sm:$0xff] %v727
        %744 = vst [vmem:[%s206 + $0xf0] sm:$0xff] %v728
        %745 = vst [vmem:[%s206 + $0xf8] sm:$0xff] %v729
        %s746 = sand.u32 %s112, 1
        %s747 = scalar_lea.sflag [#allocation4], %s746
        %s748 = sand.u32 %s112, 1
        %s749 = smul.addr %s748, 256
        %s750 = scalar_lea.vmem [#allocation5], %s749
        // Predicated region
        $region37: #{tpu_custom_call.1} parent=31 // pred_check
          %p751 = pneg %p122
        $region38: #{tpu_custom_call.1} parent=31 // pred_check_branch
          %753 = sbr.rel (%p751) target = $region40
        $region39: #{tpu_custom_call.1} parent=31 // pred_region
          %s754 = smul.u32 2, %s25
          %s756 = ssub.s32 4096, 4096
          %757 = vsyncadd %s747, %s756
          %s758 = smul.addr %s24, 32
          %s759 = sadd.s32 %s754, %s758
          %s760 = smul.addr %s759, 128
          %s761 = scalar_lea.hbm %s3, %s760
          %s762 = sshll.u32 %s750, 4
          %s763 = int_to_ptr.vmem [resolvable:$true] %s762
          %768 = dma.vmem_to_hbm [thread:$0]  %s763, 4096, %s761, %s747, 256, 256, 16
        $region40: #{tpu_custom_call.1} parent=31 // pred_fallthru
          _
      $region32: #{tpu_custom_call.1} parent=5 // pred_fallthru
        _
      %p769 = scmp.le.s32.totalorder 2, %s15
      // Predicated region
      $region41: #{tpu_custom_call.1} parent=5 // pred_check
        %p770 = pneg %p769
      $region42: #{tpu_custom_call.1} parent=5 // pred_check_branch
        %772 = sbr.rel (%p770) target = $region44
      $region43: #{tpu_custom_call.1} parent=5 // pred_region
        %s773 = ssub.s32 %s15, 2
        // Predicated region
        $region45: #{tpu_custom_call.1} parent=43 // pred_check
          %p774 = pneg %p128
        $region46: #{tpu_custom_call.1} parent=43 // pred_check_branch
          %776 = sbr.rel (%p774) target = $region48
        $region47: #{tpu_custom_call.1} parent=43 // pred_region
          %s777 = sand.u32 %s113, 1
          %s778 = scalar_lea.sflag [#allocation4], %s777
          %s779 = sand.u32 %s113, 1
          %s780 = smul.addr %s779, 256
          %s781 = scalar_lea.vmem [#allocation5], %s780
          %782 = dma.done %s778, 4096
        $region48: #{tpu_custom_call.1} parent=43 // pred_fallthru
          _
      $region44: #{tpu_custom_call.1} parent=5 // pred_fallthru
        _
    $region6: #{tpu_custom_call.1} parent=1 // loop_footer
      %s19 = sadd.s32 1, %s15
    $region7: #{tpu_custom_call.1} parent=1 // loop_footer_branch
      %14 = sbr.rel target = $region3
    $region8: #{tpu_custom_call.1} parent=1 // loop_exit
      _
    %783 = vsyncpa [#allocation3], 1
    %s784 = scalar_lea.sflag [#allocation3], 1
    %785 = vsyncpa %s784, 1
    %786 = vsyncpa [#allocation4], 1
    %s787 = scalar_lea.sflag [#allocation4], 1
    %788 = vsyncpa %s787, 1

</llo_original>
